<compile_context>
chip_gen: v5e
topology: v5e:2x2
jax: 0.10.0
libtpu: 0.0.40
codegen_flags: <defaults>
</compile_context>

<pallas_src>
import functools

import jax
import jax.numpy as jnp
from jax.experimental import pallas as pl
from jax.experimental.pallas import tpu as pltpu


def _round_up(x, m):
    return (x + m - 1) // m * m


def _gemm_bias_relu_kernel(w_ref, p_ref, b_ref, o_ref, acc_ref, *, apply_relu):
    # w_ref:   (Co_g, TK)  BN-scale-folded weights (compute dtype)
    # p_ref:   (TK, TM)    im2col patches, M on the lane axis (compute dtype)
    # b_ref:   (Co_g, 1)   folded BN bias (f32)
    # o_ref:   (Co_g, TM)  output tile
    # acc_ref: (Co_g, TM)  f32 accumulator, persistent across K grid steps
    k = pl.program_id(2)

    @pl.when(k == 0)
    def _():
        acc_ref[...] = jnp.zeros_like(acc_ref)

    acc_ref[...] += jnp.dot(w_ref[...], p_ref[...],
                            preferred_element_type=jnp.float32)

    @pl.when(k == pl.num_programs(2) - 1)
    def _():
        y = acc_ref[...] + b_ref[...]          # per-channel bias, lane-broadcast
        if apply_relu:
            y = jnp.maximum(y, 0.0)
        o_ref[...] = y.astype(o_ref.dtype)


def bn_conv2d_pallas(x, weight, gamma, beta, running_mean, running_var, *,
                     stride=1, padding=1, dilation=1, groups=2, eps=1e-5,
                     activation=True, compute_dtype=jnp.bfloat16):
    """Grouped Conv2d (bias=False) + BatchNorm2d (eval) + optional ReLU."""
    N, C_in, H, W = x.shape
    C_out, C_in_g, KH, KW = weight.shape
    G = groups
    assert C_out % G == 0 and C_in % G == 0 and C_in_g == C_in // G
    Co_g = C_out // G

    H_out = (H + 2 * padding - dilation * (KH - 1) - 1) // stride + 1
    W_out = (W + 2 * padding - dilation * (KW - 1) - 1) // stride + 1
    M = N * H_out * W_out
    K = C_in_g * KH * KW

    # ---- im2col directly in (G, K, M) order --------------------------------
    # Single leading transpose (HW planes stay contiguous); reshape lands the
    # K order (c_in_g, kh, kw) matching the OIHW weight reshape below.
    # TODO(synk): fuse patch extraction into the kernel (row-strip + halo
    # BlockSpec, shifted slices) to avoid materializing the KH*KW-x patch
    # tensor in HBM entirely.
    x_pad = jnp.pad(x, ((0, 0), (0, 0), (padding, padding), (padding, padding)))
    x_c = x_pad.transpose(1, 0, 2, 3)                      # (C_in, N, Hp, Wp)
    slices = []
    for kh in range(KH):
        for kw in range(KW):
            h0, w0 = kh * dilation, kw * dilation
            slices.append(x_c[:, :,
                              h0:h0 + (H_out - 1) * stride + 1:stride,
                              w0:w0 + (W_out - 1) * stride + 1:stride])
    p = jnp.stack(slices, axis=1)                          # (C_in, KH*KW, N, Ho, Wo)
    p = p.reshape(G, K, M)                                 # (G, K, M)

    # ---- fold BN (running stats) into weights + bias ------------------------
    scale = gamma / jnp.sqrt(running_var + eps)            # (C_out,)
    bias = beta - running_mean * scale                     # (C_out,)
    w = weight.reshape(G, Co_g, K) * scale.reshape(G, Co_g, 1)
    bias_g = bias.reshape(G, Co_g, 1).astype(jnp.float32)

    # ---- tile sizes (lane-dense output: M is the lane axis) -----------------
    M_pad = _round_up(M, 128)
    TM = min(512, M_pad)                 # ~85% HBM roofline tile width, bounded VMEM
    M_pad = _round_up(M_pad, TM)
    K_pad = _round_up(K, 8)              # sublane alignment for the contraction
    if K_pad > 1024:                     # tile K only when it is actually large
        TK = 512                         # multiple of 128 (weight block lane dim)
        K_pad = _round_up(K_pad, TK)
    else:
        TK = K_pad                       # single K step (full-extent block)

    p = jnp.pad(p, ((0, 0), (0, K_pad - K), (0, M_pad - M))).astype(compute_dtype)
    w = jnp.pad(w, ((0, 0), (0, 0), (0, K_pad - K))).astype(compute_dtype)

    grid = (G, M_pad // TM, K_pad // TK)
    kernel = functools.partial(_gemm_bias_relu_kernel, apply_relu=activation)

    out = pl.pallas_call(
        kernel,
        out_shape=jax.ShapeDtypeStruct((G, Co_g, M_pad), x.dtype),
        grid_spec=pltpu.PrefetchScalarGridSpec(
            num_scalar_prefetch=0,
            grid=grid,
            in_specs=[
                pl.BlockSpec((pl.Squeezed(), Co_g, TK),
                             lambda g, m, k: (g, 0, k)),
                pl.BlockSpec((pl.Squeezed(), TK, TM),
                             lambda g, m, k: (g, k, m)),
                pl.BlockSpec((pl.Squeezed(), Co_g, 1),
                             lambda g, m, k: (g, 0, 0)),
            ],
            out_specs=pl.BlockSpec((pl.Squeezed(), Co_g, TM),
                                   lambda g, m, k: (g, 0, m)),
            scratch_shapes=[pltpu.VMEM((Co_g, TM), jnp.float32)],
        ),
        compiler_params=pltpu.CompilerParams(
            dimension_semantics=("parallel", "parallel", "arbitrary")),
    )(w, p, bias_g)

    # (G, Co_g, M) -> (N, C_out, Ho, Wo); spatial dims stay contiguous.
    out = out[:, :, :M].reshape(G, Co_g, N, H_out, W_out)
    out = out.transpose(2, 0, 1, 3, 4).reshape(N, C_out, H_out, W_out)
    return out


def _reference(x, weight, gamma, beta, mean, var,
               stride, padding, dilation, groups, eps):
    y = jax.lax.conv_general_dilated(
        x, weight,
        window_strides=(stride, stride),
        padding=((padding, padding), (padding, padding)),
        rhs_dilation=(dilation, dilation),
        dimension_numbers=("NCHW", "OIHW", "NCHW"),
        feature_group_count=groups)
    s = (gamma / jnp.sqrt(var + eps)).reshape(1, -1, 1, 1)
    b = (beta - mean * gamma / jnp.sqrt(var + eps)).reshape(1, -1, 1, 1)
    return jnp.maximum(y * s + b, 0.0)


if __name__ == "__main__":
    # BN_Conv2d(in_channels=4, out_channels=8, kernel_size=3, stride=1,
    #           padding=1, dilation=1, groups=2, bias=False, activation=True)
    N, C_in, H, W = 2, 4, 16, 16
    C_out, KH, KW = 8, 3, 3
    stride, padding, dilation, groups = 1, 1, 1, 2
    eps = 1e-5

    key = jax.random.PRNGKey(0)
    kx, kw_, kg, kb, km, kv = jax.random.split(key, 6)

    x = jax.random.normal(kx, (N, C_in, H, W), dtype=jnp.float32)
    weight = 0.1 * jax.random.normal(
        kw_, (C_out, C_in // groups, KH, KW), dtype=jnp.float32)
    gamma = 1.0 + 0.1 * jax.random.normal(kg, (C_out,), dtype=jnp.float32)
    beta = 0.1 * jax.random.normal(kb, (C_out,), dtype=jnp.float32)
    running_mean = 0.1 * jax.random.normal(km, (C_out,), dtype=jnp.float32)
    running_var = jnp.abs(jax.random.normal(kv, (C_out,), dtype=jnp.float32)) + 0.5

    ref = jax.block_until_ready(
        _reference(x, weight, gamma, beta, running_mean, running_var,
                   stride, padding, dilation, groups, eps))

    # Tight-tolerance correctness check with an f32 GEMM path.
    out_f32 = bn_conv2d_pallas(x, weight, gamma, beta, running_mean, running_var,
                               stride=stride, padding=padding, dilation=dilation,
                               groups=groups, eps=eps,
                               compute_dtype=jnp.float32)
    out_f32 = jax.block_until_ready(out_f32)
    assert out_f32.shape == (N, C_out, H, W), out_f32.shape
    assert jnp.allclose(out_f32, ref, atol=1e-4, rtol=1e-4), "f32 mismatch vs reference"

    # Fast path: bf16 MXU feed, f32 accumulation / BN bias / ReLU.
    out_bf16 = bn_conv2d_pallas(x, weight, gamma, beta, running_mean, running_var,
                                stride=stride, padding=padding, dilation=dilation,
                                groups=groups, eps=eps,
                                compute_dtype=jnp.bfloat16)
    out_bf16 = jax.block_until_ready(out_bf16)
    assert out_bf16.shape == (N, C_out, H, W), out_bf16.shape
    assert jnp.allclose(out_bf16, ref, atol=3e-2, rtol=3e-2), "bf16 mismatch vs reference"

    print("KERNEL_OK")
</pallas_src>

<mosaic_0001>
module attributes {stable_mosaic.version = 11 : i64} {
  func.func @_gemm_bias_relu_kernel(%arg0: i32, %arg1: i32, %arg2: i32, %arg3: memref<1x4x24xf32, #tpu.memory_space<vmem>>, %arg4: memref<1x24x512xf32, #tpu.memory_space<vmem>>, %arg5: memref<1x4x1xf32, #tpu.memory_space<vmem>>, %arg6: memref<1x4x512xf32, #tpu.memory_space<vmem>>, %arg7: memref<4x512xf32, #tpu.memory_space<vmem>>) attributes {dimension_semantics = [#tpu.dimension_semantics<parallel>, #tpu.dimension_semantics<parallel>, #tpu.dimension_semantics<arbitrary>], iteration_bounds = array<i64: 2, 1, 1>, scalar_prefetch = 0 : i64, scratch_operands = 1 : i64, tpu.core_type = #tpu.core_type<tc>, window_params = [{transform_indices = @transform_0, window_bounds = array<i64: 1, 4, 24>}, {transform_indices = @transform_1, window_bounds = array<i64: 1, 24, 512>}, {transform_indices = @transform_2, window_bounds = array<i64: 1, 4, 1>}, {transform_indices = @transform_3, window_bounds = array<i64: 1, 4, 512>}]} {
    %c0_i32 = arith.constant 0 : i32
    %0 = arith.cmpi eq, %arg2, %c0_i32 : i32
    %1 = arith.extui %0 : i1 to i32
    %c0_i32_0 = arith.constant 0 : i32
    %2 = arith.cmpi ne, %1, %c0_i32_0 : i32
    scf.if %2 {
      %cst_12 = arith.constant 0.000000e+00 : f32
      %14 = vector.broadcast %cst_12 : f32 to vector<4x512xf32>
      %c0_13 = arith.constant 0 : index
      %c0_14 = arith.constant 0 : index
      %15 = vector.load %arg7[%c0_13, %c0_14] : memref<4x512xf32, #tpu.memory_space<vmem>>, vector<4x512xf32>
      tpu.vector_store %arg7[%c0_13, %c0_14], %14 {strides = array<i32>} : memref<4x512xf32, #tpu.memory_space<vmem>>, vector<4x512xf32>,
    } else {
    }
    %c0 = arith.constant 0 : index
    %c0_1 = arith.constant 0 : index
    %3 = vector.load %arg7[%c0, %c0_1] : memref<4x512xf32, #tpu.memory_space<vmem>>, vector<4x512xf32>
    %c0_2 = arith.constant 0 : index
    %c0_3 = arith.constant 0 : index
    %c0_4 = arith.constant 0 : index
    %4 = vector.load %arg3[%c0_2, %c0_3, %c0_4] : memref<1x4x24xf32, #tpu.memory_space<vmem>>, vector<1x4x24xf32>
    %5 = vector.shape_cast %4 : vector<1x4x24xf32> to vector<4x24xf32>
    %c0_5 = arith.constant 0 : index
    %c0_6 = arith.constant 0 : index
    %c0_7 = arith.constant 0 : index
    %6 = vector.load %arg4[%c0_5, %c0_6, %c0_7] : memref<1x24x512xf32, #tpu.memory_space<vmem>>, vector<1x24x512xf32>
    %7 = vector.shape_cast %6 : vector<1x24x512xf32> to vector<24x512xf32>
    %cst = arith.constant dense<0.000000e+00> : vector<4x512xf32>
    %8 = tpu.matmul %5, %7, %cst {dimension_numbers = #tpu.dot_dimension_numbers<[1], [0], [0], [1], [0, 0, 1, 1], [], []>} : vector<4x24xf32>, vector<24x512xf32>, vector<4x512xf32> -> vector<4x512xf32>
    %9 = arith.addf %3, %8 : vector<4x512xf32>
    %c0_8 = arith.constant 0 : index
    %c0_9 = arith.constant 0 : index
    %10 = vector.load %arg7[%c0_8, %c0_9] : memref<4x512xf32, #tpu.memory_space<vmem>>, vector<4x512xf32>
    tpu.vector_store %arg7[%c0_8, %c0_9], %9 {strides = array<i32>} : memref<4x512xf32, #tpu.memory_space<vmem>>, vector<4x512xf32>,
    %c0_i32_10 = arith.constant 0 : i32
    %11 = arith.cmpi eq, %arg2, %c0_i32_10 : i32
    %12 = arith.extui %11 : i1 to i32
    %c0_i32_11 = arith.constant 0 : i32
    %13 = arith.cmpi ne, %12, %c0_i32_11 : i32
    scf.if %13 {
      %c0_12 = arith.constant 0 : index
      %c0_13 = arith.constant 0 : index
      %14 = vector.load %arg7[%c0_12, %c0_13] : memref<4x512xf32, #tpu.memory_space<vmem>>, vector<4x512xf32>
      %c0_14 = arith.constant 0 : index
      %c0_15 = arith.constant 0 : index
      %c0_16 = arith.constant 0 : index
      %15 = vector.load %arg5[%c0_14, %c0_15, %c0_16] : memref<1x4x1xf32, #tpu.memory_space<vmem>>, vector<1x4x1xf32>
      %16 = vector.shape_cast %15 : vector<1x4x1xf32> to vector<4x1xf32>
      %17 = vector.broadcast %16 : vector<4x1xf32> to vector<4x512xf32>
      %18 = arith.addf %14, %17 : vector<4x512xf32>
      %cst_17 = arith.constant 0.000000e+00 : f32
      %19 = vector.broadcast %cst_17 : f32 to vector<4x512xf32>
      %20 = arith.maximumf %18, %19 : vector<4x512xf32>
      %c0_18 = arith.constant 0 : index
      %c0_19 = arith.constant 0 : index
      %c0_20 = arith.constant 0 : index
      %21 = vector.load %arg6[%c0_18, %c0_19, %c0_20] : memref<1x4x512xf32, #tpu.memory_space<vmem>>, vector<1x4x512xf32>
      %22 = vector.shape_cast %21 : vector<1x4x512xf32> to vector<4x512xf32>
      %23 = vector.shape_cast %20 : vector<4x512xf32> to vector<1x4x512xf32>
      tpu.vector_store %arg6[%c0_18, %c0_19, %c0_20], %23 {strides = array<i32>} : memref<1x4x512xf32, #tpu.memory_space<vmem>>, vector<1x4x512xf32>,
    } else {
    }
    return
  }
  func.func @transform_0(%arg0: i32, %arg1: i32, %arg2: i32) -> (i32, i32, i32) {
    %c0_i32 = arith.constant 0 : i32
    %c0_i32_0 = arith.constant 0 : i32
    return %arg0, %c0_i32, %arg2 : i32, i32, i32
  }
  func.func @transform_1(%arg0: i32, %arg1: i32, %arg2: i32) -> (i32, i32, i32) {
    %c0_i32 = arith.constant 0 : i32
    return %arg0, %arg2, %arg1 : i32, i32, i32
  }
  func.func @transform_2(%arg0: i32, %arg1: i32, %arg2: i32) -> (i32, i32, i32) {
    %c0_i32 = arith.constant 0 : i32
    %c0_i32_0 = arith.constant 0 : i32
    %c0_i32_1 = arith.constant 0 : i32
    return %arg0, %c0_i32, %c0_i32_0 : i32, i32, i32
  }
  func.func @transform_3(%arg0: i32, %arg1: i32, %arg2: i32) -> (i32, i32, i32) {
    %c0_i32 = arith.constant 0 : i32
    %c0_i32_0 = arith.constant 0 : i32
    return %arg0, %c0_i32, %arg1 : i32, i32, i32
  }
}

</mosaic_0001>

<llo_original>
// kernel: tpu_custom_call.1
$region0: #{tpu_custom_call.1}
  #allocation0 [shape = 'u32[]', space=smem, size = 0x4, offset = 0x4, fixed_abs, tag = 'smem constant byte address 0x4 - core index']
  #allocation1 [shape = 'u32[72,128]{1,0:T(1,128)}', space=vmem, size = 0x9000, scoped, tag = 'internal scratch']
  #allocation2 [shape = 'f32[4,512]{1,0:T(4,128)}', space=vmem, size = 0x2000, scoped, tag = 'scratch operand']
  %s0 = inlined_call_operand.vmem [shape: f32[2,4,24], index: 0, kind: input, shape index: {}]
  %s1 = inlined_call_operand.hbm [shape: f32[2,24,512], index: 1, kind: input, shape index: {}]
  %s2 = inlined_call_operand.vmem [shape: f32[2,4,1], index: 2, kind: input, shape index: {}]
  %s3 = inlined_call_operand.hbm [shape: f32[2,4,512], index: 3, kind: output, shape index: {}]
  %s4 = sld [smem:[#allocation0]]
  $region57: #{tpu_custom_call.1} parent=0
    _
  %s6 = ssub.s32 1, %s4
  %s7 = scalar_select 0, %s6, %s4
  $region1: #{tpu_custom_call.1} parent=0
    #allocation3 [shape = 'u8[98304]{0}', space=vmem, size = 0x18000, scoped, tag = 'input window, operand 1']
    #allocation4 [shape = 's32[2]{0}', space=sflag, size = 0x8, scoped, tag = 'scoped memory for tpu_custom_call.1']
    #allocation5 [shape = 's32[2]{0}', space=sflag, size = 0x8, scoped, tag = 'scoped memory for tpu_custom_call.1']
    #allocation6 [shape = 'u8[16384]{0}', space=vmem, size = 0x4000, scoped, tag = 'output window, operand 0']
    %8 = vsyncpa [#allocation4], 0
    %s9 = scalar_lea.sflag [#allocation4], 1
    %10 = vsyncpa %s9, 0
    %11 = vsyncpa [#allocation5], 0
    %s12 = scalar_lea.sflag [#allocation5], 1
    %13 = vsyncpa %s12, 0
    loop: start=0, step=1, limit=4
    $region2: #{tpu_custom_call.1} parent=1 // loop_pre_header
      _
    $region3: #{tpu_custom_call.1} parent=1 // loop_header
      %s15 = sphi 0, %s19
      %p16 = scmp.ge.s32.totalorder %s15, 4
      %s22 = sphi 0, %s41
      %s23 = sphi 0, %s37
      %s24 = sphi 0, %s33
      %s25 = sphi 0, %s22
      %s26 = sphi 0, %s23
      %s27 = sphi 0, %s24
      %s28 = sphi 0, %s25
      %s29 = sphi 0, %s26
      %s30 = sphi 0, %s27
      %s46 = sphi 0, %s48
      %s49 = sphi 0, %s46
      %s50 = sphi 0, %s49
      %s66 = sphi 0, %s50
      %s76 = sphi 0, %s78
      %s79 = sphi 0, %s76
      %s80 = sphi 0, %s79
      %s96 = sphi 0, %s80
      %s102 = sphi 0, %s104
      %s105 = sphi 0, %s102
      %s106 = sphi 0, %s105
      %s122 = sphi 0, %s106
      %s130 = sphi 0, %s132
      %s133 = sphi 0, %s130
      %s134 = sphi 0, %s133
      %s150 = sphi 0, %s134
    $region4: #{tpu_custom_call.1} parent=1 // loop_header_branch
      %18 = sbr.rel (%p16) target = $region8
    $region5: #{tpu_custom_call.1} parent=1 // loop_body
      %s20 = ssub.s32 %s15, 1
      %s21 = ssub.s32 %s15, 2
      %s31 = sadd.s32 1, %s24
      %p32 = scmp.ge.s32.totalorder %s31, 1
      %s33 = scalar_select %p32, 0, %s31
      %s34 = sadd.s32 1, %s23
      %s35 = scalar_select %p32, %s34, %s23
      %p36 = scmp.ge.s32.totalorder %s35, 1
      %s37 = scalar_select %p36, 0, %s35
      %s38 = sadd.s32 1, %s22
      %s39 = scalar_select %p36, %s38, %s22
      %p40 = scmp.ge.s32.totalorder %s39, 2
      %s41 = scalar_select %p40, 0, %s39
      %s42 = ssub.s32 %s22, %s41
      %s43 = ssub.s32 %s24, %s33
      %s44 = sor.u32 %s42, %s43
      %p45 = scmp.eq.s32.totalorder %s44, 0
      %s47 = sadd.s32 %s46, 1
      %s48 = scalar_select %p45, %s46, %s47
      %p51 = pneg %p45
      %p52 = scmp.eq.s32.totalorder %s15, 1
      %p53 = por %p51, %p52
      %p54 = scmp.ne.s32.totalorder %s46, %s49
      %p55 = scmp.eq.s32.totalorder %s15, 0
      %p56 = por %p54, %p55
      %p57 = scmp.ne.s32.totalorder %s46, %s49
      %p58 = scmp.eq.s32.totalorder %s20, 1
      %p59 = por %p57, %p58
      %p60 = scmp.ne.s32.totalorder %s49, %s50
      %p61 = scmp.eq.s32.totalorder %s20, 0
      %p62 = por %p60, %p61
      %p63 = scmp.ne.s32.totalorder %s49, %s50
      %p64 = scmp.eq.s32.totalorder %s21, 1
      %p65 = por %p63, %p64
      %p67 = scmp.ne.s32.totalorder %s50, %s66
      %p68 = scmp.eq.s32.totalorder %s21, 0
      %p69 = por %p67, %p68
      %s70 = ssub.s32 %s22, %s41
      %s71 = ssub.s32 %s24, %s33
      %s72 = sor.u32 %s70, %s71
      %s73 = ssub.s32 %s23, %s37
      %s74 = sor.u32 %s72, %s73
      %p75 = scmp.eq.s32.totalorder %s74, 0
      %s77 = sadd.s32 %s76, 1
      %s78 = scalar_select %p75, %s76, %s77
      %p81 = pneg %p75
      %p82 = scmp.eq.s32.totalorder %s15, 1
      %p83 = por %p81, %p82
      %p84 = scmp.ne.s32.totalorder %s76, %s79
      %p85 = scmp.eq.s32.totalorder %s15, 0
      %p86 = por %p84, %p85
      %p87 = scmp.ne.s32.totalorder %s76, %s79
      %p88 = scmp.eq.s32.totalorder %s20, 1
      %p89 = por %p87, %p88
      %p90 = scmp.ne.s32.totalorder %s79, %s80
      %p91 = scmp.eq.s32.totalorder %s20, 0
      %p92 = por %p90, %p91
      %p93 = scmp.ne.s32.totalorder %s79, %s80
      %p94 = scmp.eq.s32.totalorder %s21, 1
      %p95 = por %p93, %p94
      %p97 = scmp.ne.s32.totalorder %s80, %s96
      %p98 = scmp.eq.s32.totalorder %s21, 0
      %p99 = por %p97, %p98
      %s100 = ssub.s32 %s22, %s41
      %p101 = scmp.eq.s32.totalorder %s100, 0
      %s103 = sadd.s32 %s102, 1
      %s104 = scalar_select %p101, %s102, %s103
      %p107 = pneg %p101
      %p108 = scmp.eq.s32.totalorder %s15, 1
      %p109 = por %p107, %p108
      %p110 = scmp.ne.s32.totalorder %s102, %s105
      %p111 = scmp.eq.s32.totalorder %s15, 0
      %p112 = por %p110, %p111
      %p113 = scmp.ne.s32.totalorder %s102, %s105
      %p114 = scmp.eq.s32.totalorder %s20, 1
      %p115 = por %p113, %p114
      %p116 = scmp.ne.s32.totalorder %s105, %s106
      %p117 = scmp.eq.s32.totalorder %s20, 0
      %p118 = por %p116, %p117
      %p119 = scmp.ne.s32.totalorder %s105, %s106
      %p120 = scmp.eq.s32.totalorder %s21, 1
      %p121 = por %p119, %p120
      %p123 = scmp.ne.s32.totalorder %s106, %s122
      %p124 = scmp.eq.s32.totalorder %s21, 0
      %p125 = por %p123, %p124
      %s126 = ssub.s32 %s22, %s41
      %s127 = ssub.s32 %s23, %s37
      %s128 = sor.u32 %s126, %s127
      %p129 = scmp.eq.s32.totalorder %s128, 0
      %s131 = sadd.s32 %s130, 1
      %s132 = scalar_select %p129, %s130, %s131
      %p135 = pneg %p129
      %p136 = scmp.eq.s32.totalorder %s15, 1
      %p137 = por %p135, %p136
      %p138 = scmp.ne.s32.totalorder %s130, %s133
      %p139 = scmp.eq.s32.totalorder %s15, 0
      %p140 = por %p138, %p139
      %p141 = scmp.ne.s32.totalorder %s130, %s133
      %p142 = scmp.eq.s32.totalorder %s20, 1
      %p143 = por %p141, %p142
      %p144 = scmp.ne.s32.totalorder %s133, %s134
      %p145 = scmp.eq.s32.totalorder %s20, 0
      %p146 = por %p144, %p145
      %p147 = scmp.ne.s32.totalorder %s133, %s134
      %p148 = scmp.eq.s32.totalorder %s21, 1
      %p149 = por %p147, %p148
      %p151 = scmp.ne.s32.totalorder %s134, %s150
      %p152 = scmp.eq.s32.totalorder %s21, 0
      %p153 = por %p151, %p152
      %p154 = scmp.le.s32.totalorder 1, %s15
      %p155 = scmp.lt.s32.totalorder %s15, 3
      %p156 = pnand %p154, %p155
      %p157 = pneg %p156
      // Predicated region
      $region9: #{tpu_custom_call.1} parent=5 // pred_check
        _
      $region10: #{tpu_custom_call.1} parent=5 // pred_check_branch
        %159 = sbr.rel (%p156) target = $region12
      $region11: #{tpu_custom_call.1} parent=5 // pred_region
        %s160 = ssub.s32 %s15, 1
      $region12: #{tpu_custom_call.1} parent=5 // pred_fallthru
        _
      %p161 = scmp.lt.s32.totalorder %s15, 2
      // Predicated region
      $region13: #{tpu_custom_call.1} parent=5 // pred_check
        %p162 = pneg %p161
      $region14: #{tpu_custom_call.1} parent=5 // pred_check_branch
        %164 = sbr.rel (%p162) target = $region16
      $region15: #{tpu_custom_call.1} parent=5 // pred_region
        // Predicated region
        $region17: #{tpu_custom_call.1} parent=15 // pred_check
          %p165 = pneg %p56
        $region18: #{tpu_custom_call.1} parent=15 // pred_check_branch
          %167 = sbr.rel (%p165) target = $region20
        $region19: #{tpu_custom_call.1} parent=15 // pred_region
          %p168 = scmp.lt.s32.totalorder %s22, 1
          %s169 = scalar_select %p168, %s22, 1
          %p170 = scmp.lt.s32.totalorder %s24, 0
          %s171 = scalar_select %p170, %s24, 0
          %s172 = sadd.s32 %s171, %s169
          %s173 = smul.addr %s172, 4
          %s174 = scalar_lea.vmem %s0, %s173
        $region20: #{tpu_custom_call.1} parent=15 // pred_fallthru
          _
        // Predicated region
        $region21: #{tpu_custom_call.1} parent=15 // pred_check
          %p175 = pneg %p86
        $region22: #{tpu_custom_call.1} parent=15 // pred_check_branch
          %177 = sbr.rel (%p175) target = $region24
        $region23: #{tpu_custom_call.1} parent=15 // pred_region
          %s178 = sand.u32 %s76, 1
          %s179 = scalar_lea.sflag [#allocation4], %s178
          %s180 = sand.u32 %s76, 1
          %s181 = smul.addr %s180, 96
          %s182 = scalar_lea.vmem [#allocation3], %s181
          %s183 = smul.u32 3, %s24
          %s184 = smul.u32 4, %s23
          %186 = vsyncadd %s179, 0
          %s187 = smul.addr %s183, 4
          %s188 = sadd.s32 %s184, %s187
          %s189 = smul.addr %s22, 12
          %s190 = sadd.s32 %s188, %s189
          %s191 = smul.addr %s190, 8
          %s192 = scalar_lea.hbm %s1, %s191
          %s193 = sshll.u32 %s192, 4
          %s194 = int_to_ptr.hbm [resolvable:$true] %s193
          %s195 = sshll.u32 %s182, 4
          %s196 = int_to_ptr.vmem [resolvable:$true] %s195
          %201 = dma.hbm_to_vmem [thread:$0]  %s194, 1536, %s196, %s179, 512, 512, 32
        $region24: #{tpu_custom_call.1} parent=15 // pred_fallthru
          _
        // Predicated region
        $region25: #{tpu_custom_call.1} parent=15 // pred_check
          %p202 = pneg %p112
        $region26: #{tpu_custom_call.1} parent=15 // pred_check_branch
          %204 = sbr.rel (%p202) target = $region28
        $region27: #{tpu_custom_call.1} parent=15 // pred_region
          %p205 = scmp.lt.s32.totalorder %s22, 1
          %s206 = scalar_select %p205, %s22, 1
          %s207 = smul.addr %s206, 4
          %s208 = scalar_lea.vmem %s2, %s207
        $region28: #{tpu_custom_call.1} parent=15 // pred_fallthru
          _
      $region16: #{tpu_custom_call.1} parent=5 // pred_fallthru
        _
      %p209 = scmp.le.s32.totalorder 1, %s15
      %p210 = scmp.lt.s32.totalorder %s15, 3
      %p211 = pnand %p209, %p210
      %p212 = pneg %p211
      // Predicated region
      $region29: #{tpu_custom_call.1} parent=5 // pred_check
        _
      $region30: #{tpu_custom_call.1} parent=5 // pred_check_branch
        %214 = sbr.rel (%p211) target = $region32
      $region31: #{tpu_custom_call.1} parent=5 // pred_region
        %s215 = ssub.s32 %s15, 1
        %s216 = sand.u32 %s79, 1
        %s217 = scalar_lea.sflag [#allocation4], %s216
        %s218 = sand.u32 %s79, 1
        %s219 = smul.addr %s218, 96
        %s220 = scalar_lea.vmem [#allocation3], %s219
        // Predicated region
        $region33: #{tpu_custom_call.1} parent=31 // pred_check
          %p221 = pneg %p92
        $region34: #{tpu_custom_call.1} parent=31 // pred_check_branch
          %223 = sbr.rel (%p221) target = $region36
        $region35: #{tpu_custom_call.1} parent=31 // pred_region
          %225 = dma.done %s217, 1536
        $region36: #{tpu_custom_call.1} parent=31 // pred_fallthru
          _
        %p226 = scmp.lt.s32.totalorder %s25, 1
        %s227 = scalar_select %p226, %s25, 1
        %p228 = scmp.lt.s32.totalorder %s27, 0
        %s229 = scalar_select %p228, %s27, 0
        %s230 = sadd.s32 %s229, %s227
        %s231 = smul.addr %s230, 4
        %s232 = scalar_lea.vmem %s0, %s231
        %p233 = pneg %p62
        %p234 = pneg %p59
        %s235 = sand.u32 %s79, 1
        %s236 = scalar_lea.sflag [#allocation4], %s235
        %s237 = sand.u32 %s79, 1
        %s238 = smul.addr %s237, 96
        %s239 = scalar_lea.vmem [#allocation3], %s238
        %p240 = pneg %p92
        %p241 = pneg %p89
        %p242 = scmp.lt.s32.totalorder %s25, 1
        %s243 = scalar_select %p242, %s25, 1
        %s244 = smul.addr %s243, 4
        %s245 = scalar_lea.vmem %s2, %s244
        %p246 = pneg %p118
        %p247 = pneg %p115
        %p248 = pneg %p146
        %p249 = pneg %p143
        %s250 = sand.u32 %s133, 1
        %s251 = scalar_lea.sflag [#allocation5], %s250
        %s252 = sand.u32 %s133, 1
        %s253 = smul.addr %s252, 16
        %s254 = scalar_lea.vmem [#allocation6], %s253
        %p255 = scmp.lt.s32.totalorder %s25, 1
        %s256 = scalar_select %p255, %s25, 1
        %p257 = scmp.lt.s32.totalorder %s27, 0
        %s258 = scalar_select %p257, %s27, 0
        %s259 = sadd.s32 %s258, %s256
        %s260 = smul.addr %s259, 4
        %s261 = scalar_lea.vmem %s0, %s260
        %s262 = smul.u32 3, %s27
        %s263 = smul.u32 4, %s26
        %p264 = scmp.lt.s32.totalorder %s25, 1
        %s265 = scalar_select %p264, %s25, 1
        %s266 = smul.addr %s265, 4
        %s267 = scalar_lea.vmem %s2, %s266
        %s268 = smul.u32 4, %s26
        %p269 = scmp.eq.s32.totalorder %s27, 0
        // Predicated region
        $region37: #{tpu_custom_call.1} parent=31 // pred_check
          %p270 = pneg %p269
        $region38: #{tpu_custom_call.1} parent=31 // pred_check_branch
          %272 = sbr.rel (%p270) target = $region40
        $region39: #{tpu_custom_call.1} parent=31 // pred_region
          %273 = vst [vmem:[#allocation2] sm:$0xff] 0.0
          %274 = vst [vmem:[#allocation2 + $0x8] sm:$0xff] 0.0
        $region40: #{tpu_custom_call.1} parent=31 // pred_fallthru
          _
        %v275 = vld [vmem:[#allocation2] sm:$0xff]
        %v276 = vld [vmem:[#allocation2 + $0x8] sm:$0xff]
        %v277 = vld [vmem:[%s261] sm:$0xf]
        %v278 = vld [vmem:[%s220] sm:$0xff]
        %v279 = vld [vmem:[%s220 + $0x8] sm:$0xff]
        %v280 = vld [vmem:[%s220 + $0x10] sm:$0xff]
        %v281 = vld [vmem:[%s220 + $0x18] sm:$0xff]
        %v282 = vld [vmem:[%s220 + $0x20] sm:$0xff]
        %v283 = vld [vmem:[%s220 + $0x28] sm:$0xff]
        %v284 = vld [vmem:[%s220 + $0x30] sm:$0xff]
        %v285 = vld [vmem:[%s220 + $0x38] sm:$0xff]
        %v286 = vld [vmem:[%s220 + $0x40] sm:$0xff]
        %v287 = vld [vmem:[%s220 + $0x48] sm:$0xff]
        %v288 = vld [vmem:[%s220 + $0x50] sm:$0xff]
        %v289 = vld [vmem:[%s220 + $0x58] sm:$0xff]
        %vm290 = vcmask 195584
        %v292 = vsel %vm290, %v277, 0
        %294 = vmatpush.msra.mxu0 0.0
        %295 = vmatpush.msra.mxu0 0.0
        %296 = vmatpush.msra.mxu0 0.0
        %297 = vmatpush.msra.mxu0 0.0
        %298 = vmatpush.msra.mxu0 0.0
        %299 = vmatpush.msra.mxu0 0.0
        %300 = vmatpush.msra.mxu0 0.0
        %301 = vmatpush.msra.mxu0 0.0
        %302 = vmatpush.msra.mxu0 0.0
        %303 = vmatpush.msra.mxu0 0.0
        %304 = vmatpush.msra.mxu0 0.0
        %305 = vmatpush.msra.mxu0 0.0
        %306 = vmatpush.msra.mxu0 0.0
        %307 = vmatpush.msra.mxu0 %v286
        %308 = vmatpush.msra.mxu0 %v282
        %309 = vmatpush.msra.mxu0 %v278
        %310 = vmatmul.f32.gmra.mxu0 %v292
        %v311 = vpop.f32.mrf.mxu0
        %v312 = vadd.f32 0.0, %v311
        %313 = vdwg.mxu0
        %314 = vmatpush.msra.mxu0 0.0
        %315 = vmatpush.msra.mxu0 0.0
        %316 = vmatpush.msra.mxu0 0.0
        %317 = vmatpush.msra.mxu0 0.0
        %318 = vmatpush.msra.mxu0 0.0
        %319 = vmatpush.msra.mxu0 0.0
        %320 = vmatpush.msra.mxu0 0.0
        %321 = vmatpush.msra.mxu0 0.0
        %322 = vmatpush.msra.mxu0 0.0
        %323 = vmatpush.msra.mxu0 0.0
        %324 = vmatpush.msra.mxu0 0.0
        %325 = vmatpush.msra.mxu0 0.0
        %326 = vmatpush.msra.mxu0 0.0
        %327 = vmatpush.msra.mxu0 %v287
        %328 = vmatpush.msra.mxu0 %v283
        %329 = vmatpush.msra.mxu0 %v279
        %330 = vmatmul.f32.gmra.mxu0 %v292
        %v331 = vpop.f32.mrf.mxu0
        %v332 = vadd.f32 0.0, %v331
        %333 = vdwg.mxu0
        %334 = vmatpush.msra.mxu0 0.0
        %335 = vmatpush.msra.mxu0 0.0
        %336 = vmatpush.msra.mxu0 0.0
        %337 = vmatpush.msra.mxu0 0.0
        %338 = vmatpush.msra.mxu0 0.0
        %339 = vmatpush.msra.mxu0 0.0
        %340 = vmatpush.msra.mxu0 0.0
        %341 = vmatpush.msra.mxu0 0.0
        %342 = vmatpush.msra.mxu0 0.0
        %343 = vmatpush.msra.mxu0 0.0
        %344 = vmatpush.msra.mxu0 0.0
        %345 = vmatpush.msra.mxu0 0.0
        %346 = vmatpush.msra.mxu0 0.0
        %347 = vmatpush.msra.mxu0 %v288
        %348 = vmatpush.msra.mxu0 %v284
        %349 = vmatpush.msra.mxu0 %v280
        %350 = vmatmul.f32.gmra.mxu0 %v292
        %v351 = vpop.f32.mrf.mxu0
        %v352 = vadd.f32 0.0, %v351
        %353 = vdwg.mxu0
        %354 = vmatpush.msra.mxu0 0.0
        %355 = vmatpush.msra.mxu0 0.0
        %356 = vmatpush.msra.mxu0 0.0
        %357 = vmatpush.msra.mxu0 0.0
        %358 = vmatpush.msra.mxu0 0.0
        %359 = vmatpush.msra.mxu0 0.0
        %360 = vmatpush.msra.mxu0 0.0
        %361 = vmatpush.msra.mxu0 0.0
        %362 = vmatpush.msra.mxu0 0.0
        %363 = vmatpush.msra.mxu0 0.0
        %364 = vmatpush.msra.mxu0 0.0
        %365 = vmatpush.msra.mxu0 0.0
        %366 = vmatpush.msra.mxu0 0.0
        %367 = vmatpush.msra.mxu0 %v289
        %368 = vmatpush.msra.mxu0 %v285
        %369 = vmatpush.msra.mxu0 %v281
        %370 = vmatmul.f32.gmra.mxu0 %v292
        %v371 = vpop.f32.mrf.mxu0
        %v372 = vadd.f32 0.0, %v371
        %373 = vdwg.mxu0
        %v378 = vrot.slane %v332, 4
        %v379 = vrot.slane %v372, 4
        %vm380 = vcmask 1043456
        %v381 = vsel %vm380, %v312, %v378
        %v382 = vsel %vm380, %v352, %v379
        %v385 = vadd.f32 %v275, %v381
        %v386 = vadd.f32 %v276, %v382
        %387 = vst [vmem:[#allocation2] sm:$0xff] %v385
        %388 = vst [vmem:[#allocation2 + $0x8] sm:$0xff] %v386
        // Predicated region
        $region41: #{tpu_custom_call.1} parent=31 // pred_check
          %p389 = pneg %p269
        $region42: #{tpu_custom_call.1} parent=31 // pred_check_branch
          %391 = sbr.rel (%p389) target = $region44
        $region43: #{tpu_custom_call.1} parent=31 // pred_region
          %v392 = vld [vmem:[#allocation2] sm:$0xff]
          %v393 = vld [vmem:[#allocation2 + $0x8] sm:$0xff]
          %v394 = vld [vmem:[%s267] sm:$0xf]
          %396 = vset.pattern.permute.xlu0 0
          %397 = vperm.xlu0 %396, %v394
          %v398 = vpop.permute.xlu0 %397
          %v400 = vunpack.c.l.s4 839922192
          %v401 = vunpack.c.0.s8 %v400
          %v402 = vperm.slane %v398, %v401
          %v404 = vadd.f32 %v392, %v402
          %v405 = vadd.f32 %v393, %v402
          %v406 = vmax.f32 %v404, 0.0
          %v407 = vmax.f32 %v405, 0.0
          %408 = vst [vmem:[%s254] sm:$0xff] %v406
          %409 = vst [vmem:[%s254 + $0x8] sm:$0xff] %v407
        $region44: #{tpu_custom_call.1} parent=31 // pred_fallthru
          _
        %s410 = sand.u32 %s133, 1
        %s411 = scalar_lea.sflag [#allocation5], %s410
        %s412 = sand.u32 %s133, 1
        %s413 = smul.addr %s412, 16
        %s414 = scalar_lea.vmem [#allocation6], %s413
        // Predicated region
        $region45: #{tpu_custom_call.1} parent=31 // pred_check
          %p415 = pneg %p143
        $region46: #{tpu_custom_call.1} parent=31 // pred_check_branch
          %417 = sbr.rel (%p415) target = $region48
        $region47: #{tpu_custom_call.1} parent=31 // pred_region
          %s418 = smul.u32 4, %s26
          %420 = vsyncadd %s411, 0
          %s421 = smul.addr %s25, 4
          %s422 = sadd.s32 %s418, %s421
          %s423 = smul.addr %s422, 4
          %s424 = scalar_lea.hbm %s3, %s423
          %s426 = sshll.u32 %s414, 4
          %s427 = int_to_ptr.vmem [resolvable:$true] %s426
          %s428 = sshll.u32 %s424, 4
          %s429 = int_to_ptr.hbm [resolvable:$true] %s428
          %431 = dma.vmem_to_hbm [thread:$0]  %s427, 256, %s429, %s411
        $region48: #{tpu_custom_call.1} parent=31 // pred_fallthru
          _
      $region32: #{tpu_custom_call.1} parent=5 // pred_fallthru
        _
      %p432 = scmp.le.s32.totalorder 2, %s15
      // Predicated region
      $region49: #{tpu_custom_call.1} parent=5 // pred_check
        %p433 = pneg %p432
      $region50: #{tpu_custom_call.1} parent=5 // pred_check_branch
        %435 = sbr.rel (%p433) target = $region52
      $region51: #{tpu_custom_call.1} parent=5 // pred_region
        %s436 = ssub.s32 %s15, 2
        // Predicated region
        $region53: #{tpu_custom_call.1} parent=51 // pred_check
          %p437 = pneg %p149
        $region54: #{tpu_custom_call.1} parent=51 // pred_check_branch
          %439 = sbr.rel (%p437) target = $region56
        $region55: #{tpu_custom_call.1} parent=51 // pred_region
          %s440 = sand.u32 %s134, 1
          %s441 = scalar_lea.sflag [#allocation5], %s440
          %s442 = sand.u32 %s134, 1
          %s443 = smul.addr %s442, 16
          %s444 = scalar_lea.vmem [#allocation6], %s443
          %446 = dma.done %s441, 256
        $region56: #{tpu_custom_call.1} parent=51 // pred_fallthru
          _
      $region52: #{tpu_custom_call.1} parent=5 // pred_fallthru
        _
    $region6: #{tpu_custom_call.1} parent=1 // loop_footer
      %s19 = sadd.s32 1, %s15
    $region7: #{tpu_custom_call.1} parent=1 // loop_footer_branch
      %14 = sbr.rel target = $region3
    $region8: #{tpu_custom_call.1} parent=1 // loop_exit
      _
    %447 = vsyncpa [#allocation4], 1
    %s448 = scalar_lea.sflag [#allocation4], 1
    %449 = vsyncpa %s448, 1
    %450 = vsyncpa [#allocation5], 1
    %s451 = scalar_lea.sflag [#allocation5], 1
    %452 = vsyncpa %s451, 1

</llo_original>
